<compile_context>
chip_gen: v7x
topology: tpu7x:2x2x1
jax: 0.10.0
libtpu: 0.0.40
codegen_flags: <defaults>
</compile_context>

<pallas_src>
import functools
import math

import jax
import jax.numpy as jnp
from jax.experimental import pallas as pl
from jax.experimental.pallas import tpu as pltpu


_T_TILE_MAX = 256  # max output time rows per grid cell


def _cdiv(a, b):
    return -(-a // b)


def _round_up(x, m):
    return _cdiv(x, m) * m


# -----------------------------------------------------------------------------
# Pallas kernel: one (output-channel tile, batch, time tile) block of a
# stride-1 conv (stride already folded into the channel axis by the wrapper).
# -----------------------------------------------------------------------------
def _conv_kernel(x_ref, w_ref, b_ref, o_ref, *, J, T_tile, leaky):
    """
    x_ref: (1, 1, T_in, C_in_blk)        full (phase-folded) time window for this tile
    w_ref: (1, J, C_in_blk, C_out_blk)   dense (block-diagonal for grouped) weights
    b_ref: (1, 1, C_out_blk)
    o_ref: (1, 1, T_tile, C_out_blk)
    """
    t0 = pl.program_id(2) * T_tile
    cin_blk = x_ref.shape[-1]
    cout_blk = o_ref.shape[-1]

    def tap(j, acc):
        xs = x_ref[0, 0, pl.ds(t0 + j, T_tile), :]          # (T_tile, C_in_blk)
        w_j = w_ref[0, j]                                    # (C_in_blk, C_out_blk)
        if cin_blk == 1:                                     # layer 1: VPU broadcast-MAC
            return acc + xs * w_j
        return acc + jnp.dot(xs, w_j, preferred_element_type=jnp.float32)

    acc = jax.lax.fori_loop(0, J, tap, jnp.zeros((T_tile, cout_blk), jnp.float32))
    acc = acc + b_ref[0]
    if leaky:
        acc = jnp.where(acc >= 0, acc, 0.2 * acc)            # LeakyReLU(0.2)
    o_ref[0, 0] = acc.astype(o_ref.dtype)


# -----------------------------------------------------------------------------
# Conv1d layer wrapper (pad -> stride fold -> group pack -> pallas_call)
# -----------------------------------------------------------------------------
def conv1d_layer(h_nlc, p):
    """Weight-normed Conv1d (+ optional LeakyReLU). (N, L, C_in) -> (N, L_out, C_out)."""
    N, L, C_in = h_nlc.shape
    s, K, J, pad, G = p["stride"], p["k"], p["J"], p["pad"], p["groups"]
    n_ct, C_in_blk, C_out_blk = p["n_ct"], p["C_in_blk"], p["C_out_blk"]
    C_out = n_ct * C_out_blk

    mode = "reflect" if p["reflect"] else "constant"
    hp = jnp.pad(h_nlc, ((0, 0), (pad, pad), (0, 0)), mode=mode)
    Lp = L + 2 * pad
    L_out = (Lp - K) // s + 1

    # Fold the stride into the channel (lane) axis -> stride-1 conv with J taps.
    if s > 1:
        Lp_s = _round_up(Lp, s)
        hp = jnp.pad(hp, ((0, 0), (0, Lp_s - Lp), (0, 0)))
        xr = (hp.reshape(N, Lp_s // s, s, C_in)
                .transpose(0, 1, 3, 2)
                .reshape(N, Lp_s // s, C_in * s))
    else:
        xr = hp

    # Output-time tiling (bounded accumulator / output blocks, parallel grid axis).
    n_t = _cdiv(L_out, _T_TILE_MAX)
    T_tile = _round_up(_cdiv(L_out, n_t), 8)
    n_t = _cdiv(L_out, T_tile)
    T_out_pad = n_t * T_tile
    T_in = T_out_pad + J - 1
    T_have = xr.shape[1]
    if T_in > T_have:
        xr = jnp.pad(xr, ((0, 0), (0, T_in - T_have), (0, 0)))
    elif T_in < T_have:
        xr = xr[:, :T_in]

    # Group packing: output tile ct owns input channels [ct*C_in_blk, (ct+1)*C_in_blk).
    if G > 1:
        xg = xr.reshape(N, T_in, n_ct, C_in_blk).transpose(0, 2, 1, 3)
        ig = 1
    else:
        xg = xr.reshape(N, 1, T_in, C_in_blk)
        ig = 0

    kernel = functools.partial(_conv_kernel, J=J, T_tile=T_tile, leaky=p["leaky"])
    y = pl.pallas_call(
        kernel,
        out_shape=jax.ShapeDtypeStruct((N, n_ct, T_out_pad, C_out_blk), h_nlc.dtype),
        grid_spec=pltpu.PrefetchScalarGridSpec(
            num_scalar_prefetch=0,
            grid=(n_ct, N, n_t),
            in_specs=[
                pl.BlockSpec((1, 1, T_in, C_in_blk),
                             lambda ct, n, t: (n, ct * ig, 0, 0)),
                pl.BlockSpec((1, J, C_in_blk, C_out_blk),
                             lambda ct, n, t: (ct, 0, 0, 0)),
                pl.BlockSpec((1, 1, C_out_blk),
                             lambda ct, n, t: (ct, 0, 0)),
            ],
            out_specs=pl.BlockSpec((1, 1, T_tile, C_out_blk),
                                   lambda ct, n, t: (n, ct, t, 0)),
        ),
        compiler_params=pltpu.CompilerParams(
            dimension_semantics=("parallel", "parallel", "parallel")),
    )(xg, p["w"], p["b"])

    y = y.transpose(0, 2, 1, 3).reshape(N, T_out_pad, C_out)[:, :L_out]
    return y


# -----------------------------------------------------------------------------
# Downsampler: AvgPool1d(4, 2, padding=1, count_include_pad=False) — plain XLA
# (tiny mem-bound op; Pallas version was strictly slower, per perf review).
# -----------------------------------------------------------------------------
def avg_pool1d(x_ncl):
    zero = jnp.array(0.0, x_ncl.dtype)
    dims, strides = (1, 1, 4), (1, 1, 2)
    padding = [(0, 0), (0, 0), (1, 1)]
    s = jax.lax.reduce_window(x_ncl, zero, jax.lax.add, dims, strides, padding)
    c = jax.lax.reduce_window(jnp.ones_like(x_ncl), zero, jax.lax.add,
                              dims, strides, padding)
    return s / c


# -----------------------------------------------------------------------------
# Parameter setup (deterministic; weight_norm folded; kernel layouts precomputed)
# -----------------------------------------------------------------------------
_BLOCK_CFG = [
    dict(cin=1,    cout=16,   k=15, stride=1, pad=7,  groups=1,   reflect=True,  leaky=True),
    dict(cin=16,   cout=64,   k=41, stride=4, pad=20, groups=4,   reflect=False, leaky=True),
    dict(cin=64,   cout=256,  k=41, stride=4, pad=20, groups=16,  reflect=False, leaky=True),
    dict(cin=256,  cout=1024, k=41, stride=4, pad=20, groups=64,  reflect=False, leaky=True),
    dict(cin=1024, cout=1024, k=41, stride=4, pad=20, groups=256, reflect=False, leaky=True),
    dict(cin=1024, cout=1024, k=5,  stride=1, pad=2,  groups=1,   reflect=False, leaky=True),
    dict(cin=1024, cout=1,    k=3,  stride=1, pad=1,  groups=1,   reflect=False, leaky=False),
]


def _derive_tiling(cfg):
    cin, cout, K, s, G = cfg["cin"], cfg["cout"], cfg["k"], cfg["stride"], cfg["groups"]
    cin_pg, cout_pg = cin // G, cout // G
    J = _cdiv(K, s)
    if G == 1:
        C_out_blk = min(cout, 128)
        n_ct = cout // C_out_blk
        C_in_blk = cin * s
        P = 1
    else:
        P = min(G, max(1, 128 // cout_pg))     # pack P groups -> 128-lane output tiles
        n_ct = G // P
        C_in_blk = P * cin_pg * s
        C_out_blk = P * cout_pg
    return dict(J=J, P=P, n_ct=n_ct, C_in_blk=C_in_blk, C_out_blk=C_out_blk)


def _prep_weights(w, b, cfg, meta):
    """w: (cout, cin_pg, K) torch layout (weight_norm folded), b: (cout,)."""
    cin, cout, K, s, G = cfg["cin"], cfg["cout"], cfg["k"], cfg["stride"], cfg["groups"]
    cin_pg, cout_pg = cin // G, cout // G
    J, P, n_ct = meta["J"], meta["P"], meta["n_ct"]
    C_in_blk, C_out_blk = meta["C_in_blk"], meta["C_out_blk"]

    # Pad taps to J*s and fold the stride phases into input channels:
    # w_eff[g, j, c*s + phase, d] = w[g*cout_pg + d, c, s*j + phase]  (0 for k >= K)
    w_pad = jnp.pad(w, ((0, 0), (0, 0), (0, J * s - K)))
    w_eff = (w_pad.reshape(G, cout_pg, cin_pg, J, s)
                  .transpose(0, 3, 2, 4, 1)
                  .reshape(G, J, cin_pg * s, cout_pg))
    if G == 1:
        w_arr = (w_eff[0].reshape(J, cin_pg * s, n_ct, C_out_blk)
                         .transpose(2, 0, 1, 3))
    else:
        # Block-diagonal expansion of P packed groups per output tile.
        w_g = w_eff.reshape(n_ct, P, J, cin_pg * s, cout_pg)
        eye = jnp.eye(P, dtype=w.dtype)
        w_arr = jnp.einsum("npjcd,pq->njpcqd", w_g, eye).reshape(
            n_ct, J, C_in_blk, C_out_blk)
    b_arr = b.reshape(n_ct, 1, C_out_blk)
    return w_arr, b_arr


def _init_conv_layer(key, cfg):
    cin, cout, K, G = cfg["cin"], cfg["cout"], cfg["k"], cfg["groups"]
    cin_pg = cin // G
    kv, kg, kb = jax.random.split(key, 3)
    bound = 1.0 / math.sqrt(cin_pg * K)
    v = jax.random.uniform(kv, (cout, cin_pg, K), jnp.float32, -bound, bound)
    g = jax.random.uniform(kg, (cout, 1, 1), jnp.float32, 0.5, 1.5)
    vnorm = jnp.sqrt(jnp.sum(v * v, axis=(1, 2), keepdims=True))
    w = g * v / vnorm                                        # weight_norm: W = g * v/||v||
    b = jax.random.uniform(kb, (cout,), jnp.float32, -bound, bound)
    meta = _derive_tiling(cfg)
    w_arr, b_arr = _prep_weights(w, b, cfg, meta)
    out = dict(cfg)
    out.update(meta)
    out["w"] = w_arr
    out["b"] = b_arr
    return out


def init_wave_discriminator(key, num_D, downsampling_factor):
    params = {}
    for i in range(num_D):
        key, sub = jax.random.split(key)
        layer_keys = jax.random.split(sub, len(_BLOCK_CFG))
        params[f"disc_{downsampling_factor ** i}"] = [
            _init_conv_layer(lk, cfg) for lk, cfg in zip(layer_keys, _BLOCK_CFG)
        ]
    return params


# -----------------------------------------------------------------------------
# Forward passes
# -----------------------------------------------------------------------------
def disc_block_forward(layer_params, x_ncl):
    """WaveDiscriminatorBlock.forward — list of 7 feature maps, NCL like torch."""
    feats = []
    h = jnp.transpose(x_ncl, (0, 2, 1))                      # (N, L, C)
    for p in layer_params:
        h = conv1d_layer(h, p)
        feats.append(jnp.transpose(h, (0, 2, 1)))
    return feats


def wave_discriminator_forward(params, x_ncl, num_D, downsampling_factor):
    # TODO(synk): features_lengths() is pure python bookkeeping, not part of forward.
    results = {}
    x = x_ncl
    for i in range(num_D):
        name = f"disc_{downsampling_factor ** i}"
        results[name] = disc_block_forward(params[name], x)
        x = avg_pool1d(x)                                    # matches torch loop exactly
    return results


# -----------------------------------------------------------------------------
if __name__ == "__main__":
    num_D, downsampling_factor = 3, 2
    N, T = 2, 128                                            # small 1-channel waveform
    key = jax.random.PRNGKey(0)
    kx, kp = jax.random.split(key)
    x = jax.random.normal(kx, (N, 1, T), jnp.float32)        # torch NCL: (batch, 1, time)
    params = init_wave_discriminator(kp, num_D, downsampling_factor)

    out = wave_discriminator_forward(params, x, num_D, downsampling_factor)
    jax.block_until_ready(out)
    print("KERNEL_OK")
</pallas_src>

<mosaic_0001>
module attributes {stable_mosaic.version = 11 : i64} {
  func.func @_conv_kernel(%arg0: i32, %arg1: i32, %arg2: i32, %arg3: memref<1x1x142x1xf32, #tpu.memory_space<vmem>>, %arg4: memref<1x15x1x16xf32, #tpu.memory_space<vmem>>, %arg5: memref<1x1x16xf32, #tpu.memory_space<vmem>>, %arg6: memref<1x1x128x16xf32, #tpu.memory_space<vmem>>) attributes {dimension_semantics = [#tpu.dimension_semantics<parallel>, #tpu.dimension_semantics<parallel>, #tpu.dimension_semantics<parallel>], iteration_bounds = array<i64: 1, 2, 1>, scalar_prefetch = 0 : i64, scratch_operands = 0 : i64, tpu.core_type = #tpu.core_type<tc>, window_params = [{transform_indices = @transform_0, window_bounds = array<i64: 1, 1, 142, 1>}, {transform_indices = @transform_1, window_bounds = array<i64: 1, 15, 1, 16>}, {transform_indices = @transform_2, window_bounds = array<i64: 1, 1, 16>}, {transform_indices = @transform_3, window_bounds = array<i64: 1, 1, 128, 16>}]} {
    %c128_i32 = arith.constant 128 : i32
    %0 = arith.muli %arg2, %c128_i32 : i32
    %cst = arith.constant 0.000000e+00 : f32
    %1 = vector.broadcast %cst : f32 to vector<128x16xf32>
    %c0_i32 = arith.constant 0 : i32
    %c15_i32 = arith.constant 15 : i32
    %2 = arith.addi %c0_i32, %c15_i32 : i32
    %c1_i32 = arith.constant 1 : i32
    %3 = scf.for %arg7 = %c0_i32 to %2 step %c1_i32 iter_args(%arg8 = %1) -> (vector<128x16xf32>)  : i32 {
      %16 = arith.addi %0, %arg7 : i32
      %c0_9 = arith.constant 0 : index
      %c0_10 = arith.constant 0 : index
      %17 = arith.index_cast %16 : i32 to index
      %c0_11 = arith.constant 0 : index
      %18 = vector.load %arg3[%c0_9, %c0_10, %17, %c0_11] : memref<1x1x142x1xf32, #tpu.memory_space<vmem>>, vector<1x1x128x1xf32>
      %19 = vector.shape_cast %18 : vector<1x1x128x1xf32> to vector<128x1xf32>
      %c0_12 = arith.constant 0 : index
      %20 = arith.index_cast %arg7 : i32 to index
      %c0_13 = arith.constant 0 : index
      %c0_14 = arith.constant 0 : index
      %21 = vector.load %arg4[%c0_12, %20, %c0_13, %c0_14] : memref<1x15x1x16xf32, #tpu.memory_space<vmem>>, vector<1x1x1x16xf32>
      %22 = vector.shape_cast %21 : vector<1x1x1x16xf32> to vector<1x16xf32>
      %23 = vector.broadcast %19 : vector<128x1xf32> to vector<128x16xf32>
      %24 = vector.broadcast %22 : vector<1x16xf32> to vector<128x16xf32>
      %25 = arith.mulf %23, %24 : vector<128x16xf32>
      %26 = arith.addf %arg8, %25 : vector<128x16xf32>
      scf.yield %26 : vector<128x16xf32>
    }
    %c15_i32_0 = arith.constant 15 : i32
    %c0 = arith.constant 0 : index
    %c0_1 = arith.constant 0 : index
    %c0_2 = arith.constant 0 : index
    %4 = vector.load %arg5[%c0, %c0_1, %c0_2] : memref<1x1x16xf32, #tpu.memory_space<vmem>>, vector<1x1x16xf32>
    %5 = vector.shape_cast %4 : vector<1x1x16xf32> to vector<1x16xf32>
    %6 = vector.broadcast %5 : vector<1x16xf32> to vector<128x16xf32>
    %7 = arith.addf %3, %6 : vector<128x16xf32>
    %cst_3 = arith.constant 0.000000e+00 : f32
    %8 = vector.broadcast %cst_3 : f32 to vector<128x16xf32>
    %9 = arith.cmpf oge, %7, %8 : vector<128x16xf32>
    %cst_4 = arith.constant 2.000000e-01 : f32
    %10 = vector.broadcast %cst_4 : f32 to vector<128x16xf32>
    %11 = arith.mulf %10, %7 : vector<128x16xf32>
    %12 = arith.select %9, %7, %11 : vector<128x16xi1>, vector<128x16xf32>
    %c0_5 = arith.constant 0 : index
    %c0_6 = arith.constant 0 : index
    %c0_7 = arith.constant 0 : index
    %c0_8 = arith.constant 0 : index
    %13 = vector.load %arg6[%c0_5, %c0_6, %c0_7, %c0_8] : memref<1x1x128x16xf32, #tpu.memory_space<vmem>>, vector<1x1x128x16xf32>
    %14 = vector.shape_cast %13 : vector<1x1x128x16xf32> to vector<128x16xf32>
    %15 = vector.shape_cast %12 : vector<128x16xf32> to vector<1x1x128x16xf32>
    tpu.vector_store %arg6[%c0_5, %c0_6, %c0_7, %c0_8], %15 {strides = array<i32>} : memref<1x1x128x16xf32, #tpu.memory_space<vmem>>, vector<1x1x128x16xf32>,
    return
  }
  func.func @transform_0(%arg0: i32, %arg1: i32, %arg2: i32) -> (i32, i32, i32, i32) {
    %c0_i32 = arith.constant 0 : i32
    %0 = arith.muli %arg0, %c0_i32 : i32
    %c0_i32_0 = arith.constant 0 : i32
    %c0_i32_1 = arith.constant 0 : i32
    %c0_i32_2 = arith.constant 0 : i32
    return %arg1, %0, %c0_i32_0, %c0_i32_1 : i32, i32, i32, i32
  }
  func.func @transform_1(%arg0: i32, %arg1: i32, %arg2: i32) -> (i32, i32, i32, i32) {
    %c0_i32 = arith.constant 0 : i32
    %c0_i32_0 = arith.constant 0 : i32
    %c0_i32_1 = arith.constant 0 : i32
    %c0_i32_2 = arith.constant 0 : i32
    return %arg0, %c0_i32, %c0_i32_0, %c0_i32_1 : i32, i32, i32, i32
  }
  func.func @transform_2(%arg0: i32, %arg1: i32, %arg2: i32) -> (i32, i32, i32) {
    %c0_i32 = arith.constant 0 : i32
    %c0_i32_0 = arith.constant 0 : i32
    %c0_i32_1 = arith.constant 0 : i32
    return %arg0, %c0_i32, %c0_i32_0 : i32, i32, i32
  }
  func.func @transform_3(%arg0: i32, %arg1: i32, %arg2: i32) -> (i32, i32, i32, i32) {
    %c0_i32 = arith.constant 0 : i32
    %c0_i32_0 = arith.constant 0 : i32
    return %arg1, %arg0, %arg2, %c0_i32 : i32, i32, i32, i32
  }
}

</mosaic_0001>

<llo_original>
// kernel: tpu_custom_call.1
$region0: #{tpu_custom_call.1}
  #allocation0 [shape = 'u32[]', space=smem, size = 0x4, offset = 0x4, fixed_abs, tag = 'smem constant byte address 0x4 - core index']
  #allocation1 [shape = 'u32[144,128]{1,0:T(1,128)}', space=vmem, size = 0x12000, scoped, tag = 'internal scratch']
  %s0 = inlined_call_operand.vmem [shape: f32[2,1,142,1], index: 0, kind: input, shape index: {}]
  %s1 = inlined_call_operand.vmem [shape: f32[1,15,1,16], index: 1, kind: input, shape index: {}]
  %s2 = inlined_call_operand.vmem [shape: f32[1,1,16], index: 2, kind: input, shape index: {}]
  %s3 = inlined_call_operand.vmem [shape: f32[2,1,128,16], index: 3, kind: output, shape index: {}]
  %s4 = sld [smem:[#allocation0]]
  $region52: #{tpu_custom_call.1} parent=0
    _
  %s6 = ssub.s32 1, %s4
  %s7 = scalar_select 0, %s6, %s4
  loop: start=0, step=1, limit=4
  $region2: #{tpu_custom_call.1} parent=0 // loop_pre_header
    _
  $region3: #{tpu_custom_call.1} parent=0 // loop_header
    %s9 = sphi 0, %s13
    %p10 = scmp.ge.s32.totalorder %s9, 4
    %s16 = sphi 0, %s35
    %s17 = sphi 0, %s31
    %s18 = sphi 0, %s27
    %s19 = sphi 0, %s16
    %s20 = sphi 0, %s17
    %s21 = sphi 0, %s18
    %s22 = sphi 0, %s19
    %s23 = sphi 0, %s20
    %s24 = sphi 0, %s21
    %s38 = sphi 0, %s40
    %s41 = sphi 0, %s38
    %s42 = sphi 0, %s41
    %s58 = sphi 0, %s42
    %s64 = sphi 0, %s66
    %s67 = sphi 0, %s64
    %s68 = sphi 0, %s67
    %s84 = sphi 0, %s68
    %s90 = sphi 0, %s92
    %s93 = sphi 0, %s90
    %s94 = sphi 0, %s93
    %s110 = sphi 0, %s94
    %s120 = sphi 0, %s122
    %s123 = sphi 0, %s120
    %s124 = sphi 0, %s123
    %s140 = sphi 0, %s124
  $region4: #{tpu_custom_call.1} parent=0 // loop_header_branch
    %12 = sbr.rel (%p10) target = $region8
  $region5: #{tpu_custom_call.1} parent=0 // loop_body
    %s14 = ssub.s32 %s9, 1
    %s15 = ssub.s32 %s9, 2
    %s25 = sadd.s32 1, %s18
    %p26 = scmp.ge.s32.totalorder %s25, 1
    %s27 = scalar_select %p26, 0, %s25
    %s28 = sadd.s32 1, %s17
    %s29 = scalar_select %p26, %s28, %s17
    %p30 = scmp.ge.s32.totalorder %s29, 2
    %s31 = scalar_select %p30, 0, %s29
    %s32 = sadd.s32 1, %s16
    %s33 = scalar_select %p30, %s32, %s16
    %p34 = scmp.ge.s32.totalorder %s33, 1
    %s35 = scalar_select %p34, 0, %s33
    %s36 = ssub.s32 %s17, %s31
    %p37 = scmp.eq.s32.totalorder %s36, 0
    %s39 = sadd.s32 %s38, 1
    %s40 = scalar_select %p37, %s38, %s39
    %p43 = pneg %p37
    %p44 = scmp.eq.s32.totalorder %s9, 1
    %p45 = por %p43, %p44
    %p46 = scmp.ne.s32.totalorder %s38, %s41
    %p47 = scmp.eq.s32.totalorder %s9, 0
    %p48 = por %p46, %p47
    %p49 = scmp.ne.s32.totalorder %s38, %s41
    %p50 = scmp.eq.s32.totalorder %s14, 1
    %p51 = por %p49, %p50
    %p52 = scmp.ne.s32.totalorder %s41, %s42
    %p53 = scmp.eq.s32.totalorder %s14, 0
    %p54 = por %p52, %p53
    %p55 = scmp.ne.s32.totalorder %s41, %s42
    %p56 = scmp.eq.s32.totalorder %s15, 1
    %p57 = por %p55, %p56
    %p59 = scmp.ne.s32.totalorder %s42, %s58
    %p60 = scmp.eq.s32.totalorder %s15, 0
    %p61 = por %p59, %p60
    %s62 = ssub.s32 %s16, %s35
    %p63 = scmp.eq.s32.totalorder %s62, 0
    %s65 = sadd.s32 %s64, 1
    %s66 = scalar_select %p63, %s64, %s65
    %p69 = pneg %p63
    %p70 = scmp.eq.s32.totalorder %s9, 1
    %p71 = por %p69, %p70
    %p72 = scmp.ne.s32.totalorder %s64, %s67
    %p73 = scmp.eq.s32.totalorder %s9, 0
    %p74 = por %p72, %p73
    %p75 = scmp.ne.s32.totalorder %s64, %s67
    %p76 = scmp.eq.s32.totalorder %s14, 1
    %p77 = por %p75, %p76
    %p78 = scmp.ne.s32.totalorder %s67, %s68
    %p79 = scmp.eq.s32.totalorder %s14, 0
    %p80 = por %p78, %p79
    %p81 = scmp.ne.s32.totalorder %s67, %s68
    %p82 = scmp.eq.s32.totalorder %s15, 1
    %p83 = por %p81, %p82
    %p85 = scmp.ne.s32.totalorder %s68, %s84
    %p86 = scmp.eq.s32.totalorder %s15, 0
    %p87 = por %p85, %p86
    %s88 = ssub.s32 %s16, %s35
    %p89 = scmp.eq.s32.totalorder %s88, 0
    %s91 = sadd.s32 %s90, 1
    %s92 = scalar_select %p89, %s90, %s91
    %p95 = pneg %p89
    %p96 = scmp.eq.s32.totalorder %s9, 1
    %p97 = por %p95, %p96
    %p98 = scmp.ne.s32.totalorder %s90, %s93
    %p99 = scmp.eq.s32.totalorder %s9, 0
    %p100 = por %p98, %p99
    %p101 = scmp.ne.s32.totalorder %s90, %s93
    %p102 = scmp.eq.s32.totalorder %s14, 1
    %p103 = por %p101, %p102
    %p104 = scmp.ne.s32.totalorder %s93, %s94
    %p105 = scmp.eq.s32.totalorder %s14, 0
    %p106 = por %p104, %p105
    %p107 = scmp.ne.s32.totalorder %s93, %s94
    %p108 = scmp.eq.s32.totalorder %s15, 1
    %p109 = por %p107, %p108
    %p111 = scmp.ne.s32.totalorder %s94, %s110
    %p112 = scmp.eq.s32.totalorder %s15, 0
    %p113 = por %p111, %p112
    %s114 = ssub.s32 %s17, %s31
    %s115 = ssub.s32 %s16, %s35
    %s116 = sor.u32 %s114, %s115
    %s117 = ssub.s32 %s18, %s27
    %s118 = sor.u32 %s116, %s117
    %p119 = scmp.eq.s32.totalorder %s118, 0
    %s121 = sadd.s32 %s120, 1
    %s122 = scalar_select %p119, %s120, %s121
    %p125 = pneg %p119
    %p126 = scmp.eq.s32.totalorder %s9, 1
    %p127 = por %p125, %p126
    %p128 = scmp.ne.s32.totalorder %s120, %s123
    %p129 = scmp.eq.s32.totalorder %s9, 0
    %p130 = por %p128, %p129
    %p131 = scmp.ne.s32.totalorder %s120, %s123
    %p132 = scmp.eq.s32.totalorder %s14, 1
    %p133 = por %p131, %p132
    %p134 = scmp.ne.s32.totalorder %s123, %s124
    %p135 = scmp.eq.s32.totalorder %s14, 0
    %p136 = por %p134, %p135
    %p137 = scmp.ne.s32.totalorder %s123, %s124
    %p138 = scmp.eq.s32.totalorder %s15, 1
    %p139 = por %p137, %p138
    %p141 = scmp.ne.s32.totalorder %s124, %s140
    %p142 = scmp.eq.s32.totalorder %s15, 0
    %p143 = por %p141, %p142
    %p144 = scmp.le.s32.totalorder 1, %s9
    %p145 = scmp.lt.s32.totalorder %s9, 3
    %p146 = pnand %p144, %p145
    %p147 = pneg %p146
    // Predicated region
    $region9: #{tpu_custom_call.1} parent=5 // pred_check
      _
    $region10: #{tpu_custom_call.1} parent=5 // pred_check_branch
      %149 = sbr.rel (%p146) target = $region12
    $region11: #{tpu_custom_call.1} parent=5 // pred_region
      %s150 = ssub.s32 %s9, 1
      // Predicated region
      $region13: #{tpu_custom_call.1} parent=11 // pred_check
        %p151 = pneg %p80
      $region14: #{tpu_custom_call.1} parent=11 // pred_check_branch
        %153 = sbr.rel (%p151) target = $region16
      $region15: #{tpu_custom_call.1} parent=11 // pred_region
        %p154 = scmp.lt.s32.totalorder %s19, 0
        %s155 = scalar_select %p154, %s19, 0
        %s156 = smul.addr %s155, 15
        %s157 = scalar_lea.vmem %s1, %s156
      $region16: #{tpu_custom_call.1} parent=11 // pred_fallthru
        _
      // Predicated region
      $region17: #{tpu_custom_call.1} parent=11 // pred_check
        %p158 = pneg %p106
      $region18: #{tpu_custom_call.1} parent=11 // pred_check_branch
        %160 = sbr.rel (%p158) target = $region20
      $region19: #{tpu_custom_call.1} parent=11 // pred_region
        %p161 = scmp.lt.s32.totalorder %s19, 0
        %s162 = scalar_select %p161, %s19, 0
        %s163 = scalar_lea.vmem %s2, %s162
      $region20: #{tpu_custom_call.1} parent=11 // pred_fallthru
        _
    $region12: #{tpu_custom_call.1} parent=5 // pred_fallthru
      _
    %p164 = scmp.lt.s32.totalorder %s9, 2
    // Predicated region
    $region21: #{tpu_custom_call.1} parent=5 // pred_check
      %p165 = pneg %p164
    $region22: #{tpu_custom_call.1} parent=5 // pred_check_branch
      %167 = sbr.rel (%p165) target = $region24
    $region23: #{tpu_custom_call.1} parent=5 // pred_region
      // Predicated region
      $region25: #{tpu_custom_call.1} parent=23 // pred_check
        %p168 = pneg %p48
      $region26: #{tpu_custom_call.1} parent=23 // pred_check_branch
        %170 = sbr.rel (%p168) target = $region28
      $region27: #{tpu_custom_call.1} parent=23 // pred_region
        %p171 = scmp.lt.s32.totalorder %s17, 1
        %s172 = scalar_select %p171, %s17, 1
        %s173 = smul.addr %s172, 18
        %s174 = smul.addr %s173, 8
        %s175 = scalar_lea.vmem %s0, %s174
      $region28: #{tpu_custom_call.1} parent=23 // pred_fallthru
        _
    $region24: #{tpu_custom_call.1} parent=5 // pred_fallthru
      _
    %p176 = scmp.le.s32.totalorder 1, %s9
    %p177 = scmp.lt.s32.totalorder %s9, 3
    %p178 = pnand %p176, %p177
    %p179 = pneg %p178
    // Predicated region
    $region29: #{tpu_custom_call.1} parent=5 // pred_check
      _
    $region30: #{tpu_custom_call.1} parent=5 // pred_check_branch
      %181 = sbr.rel (%p178) target = $region32
    $region31: #{tpu_custom_call.1} parent=5 // pred_region
      %s182 = ssub.s32 %s9, 1
      %p183 = scmp.lt.s32.totalorder %s20, 1
      %s184 = scalar_select %p183, %s20, 1
      %s185 = smul.addr %s184, 18
      %s186 = smul.addr %s185, 8
      %s187 = scalar_lea.vmem %s0, %s186
      %p188 = pneg %p54
      %p189 = pneg %p51
      %p190 = scmp.lt.s32.totalorder %s19, 0
      %s191 = scalar_select %p190, %s19, 0
      %s192 = smul.addr %s191, 15
      %s193 = scalar_lea.vmem %s1, %s192
      %p194 = pneg %p80
      %p195 = pneg %p77
      %p196 = scmp.lt.s32.totalorder %s19, 0
      %s197 = scalar_select %p196, %s19, 0
      %s198 = scalar_lea.vmem %s2, %s197
      %p199 = pneg %p106
      %p200 = pneg %p103
      %p201 = pneg %p136
      %p202 = pneg %p133
      %s203 = smul.u32 16, %s21
      %p204 = scmp.lt.s32.totalorder %s20, 1
      %s205 = scalar_select %p204, %s20, 1
      %p206 = scmp.lt.s32.totalorder %s19, 0
      %s207 = scalar_select %p206, %s19, 0
      %p208 = scmp.lt.s32.totalorder %s203, 15
      %s209 = scalar_select %p208, %s203, 15
      %s210 = smul.addr %s207, 16
      %s211 = sadd.s32 %s209, %s210
      %s212 = smul.addr %s205, 16
      %s213 = sadd.s32 %s211, %s212
      %s214 = smul.addr %s213, 8
      %s215 = scalar_lea.vmem %s3, %s214
      %p216 = scmp.lt.s32.totalorder %s20, 1
      %s217 = scalar_select %p216, %s20, 1
      %s218 = smul.addr %s217, 18
      %s219 = smul.addr %s218, 8
      %s220 = scalar_lea.vmem %s0, %s219
      %p221 = scmp.lt.s32.totalorder %s19, 0
      %s222 = scalar_select %p221, %s19, 0
      %s223 = smul.addr %s222, 15
      %s224 = scalar_lea.vmem %s1, %s223
      %p225 = scmp.lt.s32.totalorder %s19, 0
      %s226 = scalar_select %p225, %s19, 0
      %s227 = scalar_lea.vmem %s2, %s226
      %s228 = smul.u32 16, %s21
      %p229 = scmp.lt.s32.totalorder %s20, 1
      %s230 = scalar_select %p229, %s20, 1
      %p231 = scmp.lt.s32.totalorder %s19, 0
      %s232 = scalar_select %p231, %s19, 0
      %p233 = scmp.lt.s32.totalorder %s228, 15
      %s234 = scalar_select %p233, %s228, 15
      %s235 = smul.addr %s232, 16
      %s236 = sadd.s32 %s234, %s235
      %s237 = smul.addr %s230, 16
      %s238 = sadd.s32 %s236, %s237
      %s239 = smul.addr %s238, 8
      %s240 = scalar_lea.vmem %s3, %s239
      %s241 = smul.u32 16, %s21
      %s242 = smul.u32 %s21, 128
      loop: start=0, step=1, limit=15
      $region33: #{tpu_custom_call.1} parent=31 // loop_pre_header
        _
      $region34: #{tpu_custom_call.1} parent=31 // loop_header
        %s244 = sphi 0, %s248
        %p245 = scmp.ge.s32.totalorder %s244, 15
        %v249 = vphi 0.0, %v387
        %v250 = vphi 0.0, %v388
        %v251 = vphi 0.0, %v389
        %v252 = vphi 0.0, %v390
        %v253 = vphi 0.0, %v391
        %v254 = vphi 0.0, %v392
        %v255 = vphi 0.0, %v393
        %v256 = vphi 0.0, %v394
        %v257 = vphi 0.0, %v395
        %v258 = vphi 0.0, %v396
        %v259 = vphi 0.0, %v397
        %v260 = vphi 0.0, %v398
        %v261 = vphi 0.0, %v399
        %v262 = vphi 0.0, %v400
        %v263 = vphi 0.0, %v401
        %v264 = vphi 0.0, %v402
      $region35: #{tpu_custom_call.1} parent=31 // loop_header_branch
        %247 = sbr.rel (%p245) target = $region39
      $region36: #{tpu_custom_call.1} parent=31 // loop_body
        %s265 = sadd.s32 %s242, %s244
        %s266 = scalar_lea.vmem %s220, %s265
        %v267 = vld [vmem:[%s266] sm:$0xff]
        %v268 = vld [vmem:[%s266 + $0x8] sm:$0xff]
        %v269 = vld [vmem:[%s266 + $0x10] sm:$0xff]
        %v270 = vld [vmem:[%s266 + $0x18] sm:$0xff]
        %v271 = vld [vmem:[%s266 + $0x20] sm:$0xff]
        %v272 = vld [vmem:[%s266 + $0x28] sm:$0xff]
        %v273 = vld [vmem:[%s266 + $0x30] sm:$0xff]
        %v274 = vld [vmem:[%s266 + $0x38] sm:$0xff]
        %v275 = vld [vmem:[%s266 + $0x40] sm:$0xff]
        %v276 = vld [vmem:[%s266 + $0x48] sm:$0xff]
        %v277 = vld [vmem:[%s266 + $0x50] sm:$0xff]
        %v278 = vld [vmem:[%s266 + $0x58] sm:$0xff]
        %v279 = vld [vmem:[%s266 + $0x60] sm:$0xff]
        %v280 = vld [vmem:[%s266 + $0x68] sm:$0xff]
        %v281 = vld [vmem:[%s266 + $0x70] sm:$0xff]
        %v282 = vld [vmem:[%s266 + $0x78] sm:$0xff]
        %s283 = scalar_lea.vmem %s224, %s244
        %v284 = vld [vmem:[%s283] sm:$0x1]
        %286 = vset.pattern.permute.xlu0 0
        %287 = vperm.xlu0 %286, %v267
        %v288 = vpop.permute.xlu0 %287
        %291 = vset.pattern.permute.xlu0 0
        %292 = vperm.xlu0 %291, %v268
        %v293 = vpop.permute.xlu0 %292
        %296 = vset.pattern.permute.xlu0 0
        %297 = vperm.xlu0 %296, %v269
        %v298 = vpop.permute.xlu0 %297
        %301 = vset.pattern.permute.xlu0 0
        %302 = vperm.xlu0 %301, %v270
        %v303 = vpop.permute.xlu0 %302
        %306 = vset.pattern.permute.xlu0 0
        %307 = vperm.xlu0 %306, %v271
        %v308 = vpop.permute.xlu0 %307
        %311 = vset.pattern.permute.xlu0 0
        %312 = vperm.xlu0 %311, %v272
        %v313 = vpop.permute.xlu0 %312
        %316 = vset.pattern.permute.xlu0 0
        %317 = vperm.xlu0 %316, %v273
        %v318 = vpop.permute.xlu0 %317
        %321 = vset.pattern.permute.xlu0 0
        %322 = vperm.xlu0 %321, %v274
        %v323 = vpop.permute.xlu0 %322
        %326 = vset.pattern.permute.xlu0 0
        %327 = vperm.xlu0 %326, %v275
        %v328 = vpop.permute.xlu0 %327
        %331 = vset.pattern.permute.xlu0 0
        %332 = vperm.xlu0 %331, %v276
        %v333 = vpop.permute.xlu0 %332
        %336 = vset.pattern.permute.xlu0 0
        %337 = vperm.xlu0 %336, %v277
        %v338 = vpop.permute.xlu0 %337
        %341 = vset.pattern.permute.xlu0 0
        %342 = vperm.xlu0 %341, %v278
        %v343 = vpop.permute.xlu0 %342
        %346 = vset.pattern.permute.xlu0 0
        %347 = vperm.xlu0 %346, %v279
        %v348 = vpop.permute.xlu0 %347
        %351 = vset.pattern.permute.xlu0 0
        %352 = vperm.xlu0 %351, %v280
        %v353 = vpop.permute.xlu0 %352
        %356 = vset.pattern.permute.xlu0 0
        %357 = vperm.xlu0 %356, %v281
        %v358 = vpop.permute.xlu0 %357
        %361 = vset.pattern.permute.xlu0 0
        %362 = vperm.xlu0 %361, %v282
        %v363 = vpop.permute.xlu0 %362
        %v366 = vlaneseq
        %v367 = vshrl.u32 %v366, 7
        %v368 = vsub.s32 0, %v367
        %v369 = vrot.slane %v284, %v368
        %v371 = vmul.f32 %v288, %v369
        %v372 = vmul.f32 %v293, %v369
        %v373 = vmul.f32 %v298, %v369
        %v374 = vmul.f32 %v303, %v369
        %v375 = vmul.f32 %v308, %v369
        %v376 = vmul.f32 %v313, %v369
        %v377 = vmul.f32 %v318, %v369
        %v378 = vmul.f32 %v323, %v369
        %v379 = vmul.f32 %v328, %v369
        %v380 = vmul.f32 %v333, %v369
        %v381 = vmul.f32 %v338, %v369
        %v382 = vmul.f32 %v343, %v369
        %v383 = vmul.f32 %v348, %v369
        %v384 = vmul.f32 %v353, %v369
        %v385 = vmul.f32 %v358, %v369
        %v386 = vmul.f32 %v363, %v369
        %v387 = vadd.f32 %v249, %v371
        %v388 = vadd.f32 %v250, %v372
        %v389 = vadd.f32 %v251, %v373
        %v390 = vadd.f32 %v252, %v374
        %v391 = vadd.f32 %v253, %v375
        %v392 = vadd.f32 %v254, %v376
        %v393 = vadd.f32 %v255, %v377
        %v394 = vadd.f32 %v256, %v378
        %v395 = vadd.f32 %v257, %v379
        %v396 = vadd.f32 %v258, %v380
        %v397 = vadd.f32 %v259, %v381
        %v398 = vadd.f32 %v260, %v382
        %v399 = vadd.f32 %v261, %v383
        %v400 = vadd.f32 %v262, %v384
        %v401 = vadd.f32 %v263, %v385
        %v402 = vadd.f32 %v264, %v386
      $region37: #{tpu_custom_call.1} parent=31 // loop_footer
        %s248 = sadd.s32 1, %s244
      $region38: #{tpu_custom_call.1} parent=31 // loop_footer_branch
        %243 = sbr.rel target = $region34
      $region39: #{tpu_custom_call.1} parent=31 // loop_exit
        _
      %v403 = vld [vmem:[%s227] sm:$0x1]
      %v405 = vlaneseq
      %v406 = vshrl.u32 %v405, 7
      %v407 = vsub.s32 0, %v406
      %v408 = vrot.slane %v403, %v407
      %v410 = vadd.f32 %v249, %v408
      %v411 = vadd.f32 %v250, %v408
      %v412 = vadd.f32 %v251, %v408
      %v413 = vadd.f32 %v252, %v408
      %v414 = vadd.f32 %v253, %v408
      %v415 = vadd.f32 %v254, %v408
      %v416 = vadd.f32 %v255, %v408
      %v417 = vadd.f32 %v256, %v408
      %v418 = vadd.f32 %v257, %v408
      %v419 = vadd.f32 %v258, %v408
      %v420 = vadd.f32 %v259, %v408
      %v421 = vadd.f32 %v260, %v408
      %v422 = vadd.f32 %v261, %v408
      %v423 = vadd.f32 %v262, %v408
      %v424 = vadd.f32 %v263, %v408
      %v425 = vadd.f32 %v264, %v408
      %vm426 = vcmp.ge.f32.partialorder %v410, 0.0
      %vm427 = vcmp.ge.f32.partialorder %v411, 0.0
      %vm428 = vcmp.ge.f32.partialorder %v412, 0.0
      %vm429 = vcmp.ge.f32.partialorder %v413, 0.0
      %vm430 = vcmp.ge.f32.partialorder %v414, 0.0
      %vm431 = vcmp.ge.f32.partialorder %v415, 0.0
      %vm432 = vcmp.ge.f32.partialorder %v416, 0.0
      %vm433 = vcmp.ge.f32.partialorder %v417, 0.0
      %vm434 = vcmp.ge.f32.partialorder %v418, 0.0
      %vm435 = vcmp.ge.f32.partialorder %v419, 0.0
      %vm436 = vcmp.ge.f32.partialorder %v420, 0.0
      %vm437 = vcmp.ge.f32.partialorder %v421, 0.0
      %vm438 = vcmp.ge.f32.partialorder %v422, 0.0
      %vm439 = vcmp.ge.f32.partialorder %v423, 0.0
      %vm440 = vcmp.ge.f32.partialorder %v424, 0.0
      %vm441 = vcmp.ge.f32.partialorder %v425, 0.0
      %v442 = vmul.f32 %v410, 0.2
      %v443 = vmul.f32 %v411, 0.2
      %v444 = vmul.f32 %v412, 0.2
      %v445 = vmul.f32 %v413, 0.2
      %v446 = vmul.f32 %v414, 0.2
      %v447 = vmul.f32 %v415, 0.2
      %v448 = vmul.f32 %v416, 0.2
      %v449 = vmul.f32 %v417, 0.2
      %v450 = vmul.f32 %v418, 0.2
      %v451 = vmul.f32 %v419, 0.2
      %v452 = vmul.f32 %v420, 0.2
      %v453 = vmul.f32 %v421, 0.2
      %v454 = vmul.f32 %v422, 0.2
      %v455 = vmul.f32 %v423, 0.2
      %v456 = vmul.f32 %v424, 0.2
      %v457 = vmul.f32 %v425, 0.2
      %v458 = vsel %vm426, %v410, %v442
      %v459 = vsel %vm427, %v411, %v443
      %v460 = vsel %vm428, %v412, %v444
      %v461 = vsel %vm429, %v413, %v445
      %v462 = vsel %vm430, %v414, %v446
      %v463 = vsel %vm431, %v415, %v447
      %v464 = vsel %vm432, %v416, %v448
      %v465 = vsel %vm433, %v417, %v449
      %v466 = vsel %vm434, %v418, %v450
      %v467 = vsel %vm435, %v419, %v451
      %v468 = vsel %vm436, %v420, %v452
      %v469 = vsel %vm437, %v421, %v453
      %v470 = vsel %vm438, %v422, %v454
      %v471 = vsel %vm439, %v423, %v455
      %v472 = vsel %vm440, %v424, %v456
      %v473 = vsel %vm441, %v425, %v457
      %vm474 = vcmask 130048
      %475 = vst.msk [vmem:[%s240] sm:$0xff] %vm474, %v458
      %476 = vst.msk [vmem:[%s240 + $0x8] sm:$0xff] %vm474, %v459
      %477 = vst.msk [vmem:[%s240 + $0x10] sm:$0xff] %vm474, %v460
      %478 = vst.msk [vmem:[%s240 + $0x18] sm:$0xff] %vm474, %v461
      %479 = vst.msk [vmem:[%s240 + $0x20] sm:$0xff] %vm474, %v462
      %480 = vst.msk [vmem:[%s240 + $0x28] sm:$0xff] %vm474, %v463
      %481 = vst.msk [vmem:[%s240 + $0x30] sm:$0xff] %vm474, %v464
      %482 = vst.msk [vmem:[%s240 + $0x38] sm:$0xff] %vm474, %v465
      %483 = vst.msk [vmem:[%s240 + $0x40] sm:$0xff] %vm474, %v466
      %484 = vst.msk [vmem:[%s240 + $0x48] sm:$0xff] %vm474, %v467
      %485 = vst.msk [vmem:[%s240 + $0x50] sm:$0xff] %vm474, %v468
      %486 = vst.msk [vmem:[%s240 + $0x58] sm:$0xff] %vm474, %v469
      %487 = vst.msk [vmem:[%s240 + $0x60] sm:$0xff] %vm474, %v470
      %488 = vst.msk [vmem:[%s240 + $0x68] sm:$0xff] %vm474, %v471
      %489 = vst.msk [vmem:[%s240 + $0x70] sm:$0xff] %vm474, %v472
      %490 = vst.msk [vmem:[%s240 + $0x78] sm:$0xff] %vm474, %v473
      %s491 = smul.u32 16, %s21
      %p492 = scmp.lt.s32.totalorder %s20, 1
      %s493 = scalar_select %p492, %s20, 1
      %p494 = scmp.lt.s32.totalorder %s19, 0
      %s495 = scalar_select %p494, %s19, 0
      %p496 = scmp.lt.s32.totalorder %s491, 15
      %s497 = scalar_select %p496, %s491, 15
      %s498 = smul.addr %s495, 16
      %s499 = sadd.s32 %s497, %s498
      %s500 = smul.addr %s493, 16
      %s501 = sadd.s32 %s499, %s500
      %s502 = smul.addr %s501, 8
      %s503 = scalar_lea.vmem %s3, %s502
      // Predicated region
      $region40: #{tpu_custom_call.1} parent=31 // pred_check
        %p504 = pneg %p133
      $region41: #{tpu_custom_call.1} parent=31 // pred_check_branch
        %506 = sbr.rel (%p504) target = $region43
      $region42: #{tpu_custom_call.1} parent=31 // pred_region
        %s507 = smul.u32 16, %s21
      $region43: #{tpu_custom_call.1} parent=31 // pred_fallthru
        _
    $region32: #{tpu_custom_call.1} parent=5 // pred_fallthru
      _
    %p508 = scmp.le.s32.totalorder 2, %s9
    // Predicated region
    $region44: #{tpu_custom_call.1} parent=5 // pred_check
      %p509 = pneg %p508
    $region45: #{tpu_custom_call.1} parent=5 // pred_check_branch
      %511 = sbr.rel (%p509) target = $region47
    $region46: #{tpu_custom_call.1} parent=5 // pred_region
      %s512 = ssub.s32 %s9, 2
      // Predicated region
      $region48: #{tpu_custom_call.1} parent=46 // pred_check
        %p513 = pneg %p139
      $region49: #{tpu_custom_call.1} parent=46 // pred_check_branch
        %515 = sbr.rel (%p513) target = $region51
      $region50: #{tpu_custom_call.1} parent=46 // pred_region
        %s516 = smul.u32 16, %s24
        %p517 = scmp.lt.s32.totalorder %s23, 1
        %s518 = scalar_select %p517, %s23, 1
        %p519 = scmp.lt.s32.totalorder %s22, 0
        %s520 = scalar_select %p519, %s22, 0
        %p521 = scmp.lt.s32.totalorder %s516, 15
        %s522 = scalar_select %p521, %s516, 15
        %s523 = smul.addr %s520, 16
        %s524 = sadd.s32 %s522, %s523
        %s525 = smul.addr %s518, 16
        %s526 = sadd.s32 %s524, %s525
        %s527 = smul.addr %s526, 8
        %s528 = scalar_lea.vmem %s3, %s527
      $region51: #{tpu_custom_call.1} parent=46 // pred_fallthru
        _
    $region47: #{tpu_custom_call.1} parent=5 // pred_fallthru
      _
  $region6: #{tpu_custom_call.1} parent=0 // loop_footer
    %s13 = sadd.s32 1, %s9
  $region7: #{tpu_custom_call.1} parent=0 // loop_footer_branch
    %8 = sbr.rel target = $region3
  $region8: #{tpu_custom_call.1} parent=0 // loop_exit
    _

</llo_original>
